<compile_context>
chip_gen: v7x
topology: tpu7x:2x2x1
jax: 0.10.0
libtpu: 0.0.40
codegen_flags: <defaults>
</compile_context>

<pallas_src>
import jax
import jax.numpy as jnp
from jax.experimental import pallas as pl
from jax.experimental.pallas import tpu as pltpu


def _round_up(x, m):
    return ((x + m - 1) // m) * m


def _vmem_budget_bytes():
    """Usable per-core VMEM with headroom for compiler-internal scratch."""
    cap = 64 * 1024 * 1024  # conservative (v7x-sized) fallback
    try:
        cap = int(pltpu.get_tpu_info().vmem_capacity_bytes)
    except Exception:
        pass
    # Leave ~12 MiB headroom; never ask for more than ~110 MiB even on 128 MiB
    # parts so semaphores / double-buffered bias tiles / spills always fit.
    return int(min(cap - 12 * 1024 * 1024, 110 * 1024 * 1024))


def _ffn_chunked_kernel(x_ref, w1_ref, b1_ref, w2_ref, b2_ref, o_ref, acc_ref):
    """Hidden dim processed in chunks (grid axis 1); f32 accumulator scratch."""
    k = pl.program_id(1)

    @pl.when(k == 0)
    def _():
        acc_ref[...] = jnp.zeros_like(acc_ref)

    h = jnp.dot(x_ref[...], w1_ref[...],
                preferred_element_type=jnp.float32)          # (TM, TH)
    h = jnp.maximum(h + b1_ref[...], 0.0)
    acc_ref[...] += jnp.dot(h.astype(w2_ref.dtype), w2_ref[...],
                            preferred_element_type=jnp.float32)  # (TM, Cp)

    @pl.when(k == pl.num_programs(1) - 1)
    def _():
        # Dropout: identity (eval mode).
        o_ref[...] = (acc_ref[...] + b2_ref[...]).astype(o_ref.dtype)


def _ffn_resident_kernel(x_ref, w1_ref, b1_ref, w2_ref, b2_ref, o_ref):
    """Whole W1/W2 resident in VMEM; single 'parallel' row-tile grid axis."""
    h = jnp.dot(x_ref[...], w1_ref[...],
                preferred_element_type=jnp.float32)          # (TM, Hp)
    h = jnp.maximum(h + b1_ref[...], 0.0)
    y = jnp.dot(h.astype(w2_ref.dtype), w2_ref[...],
                preferred_element_type=jnp.float32)          # (TM, Cp)
    # Dropout: identity (eval mode).
    o_ref[...] = (y + b2_ref[...]).astype(o_ref.dtype)


def make_feed_forward(w1, b1, w2, b2, *, compute_dtype=jnp.bfloat16,
                      out_dtype=None, tm_max=1024, th_max=2048,
                      force_path=None):
    """Pad + cast the weights once; return apply(x) -> (B, T, C)."""
    C, H = w1.shape
    assert w2.shape == (H, C) and b1.shape == (H,) and b2.shape == (C,)

    compute_dtype = jnp.dtype(compute_dtype)
    itemsize = compute_dtype.itemsize
    row_align = max(8, 32 // itemsize)        # f32: 8, bf16: 16, int8/fp8: 32
    budget = _vmem_budget_bytes()

    Cp = _round_up(C, 128)
    # Hidden tile: multiples of 256 fill the 256-wide v6e/v7x MXU.
    h_align = 256 if H >= 256 else 128
    TH0 = min(_round_up(th_max, h_align), _round_up(H, h_align))
    Hp = _round_up(H, TH0)

    # --- one-time weight preparation (hoisted out of the per-call path) ---
    w1p = w1 if (Cp, Hp) == (C, H) else jnp.pad(w1, ((0, Cp - C), (0, Hp - H)))
    w2p = w2 if (Hp, Cp) == (H, C) else jnp.pad(w2, ((0, Hp - H), (0, Cp - C)))
    w1p = w1p.astype(compute_dtype)
    w2p = w2p.astype(compute_dtype)
    b1p = jnp.pad(b1.astype(jnp.float32), (0, Hp - H)).reshape(1, Hp)
    b2p = jnp.pad(b2.astype(jnp.float32), (0, Cp - C)).reshape(1, Cp)

    def apply(x):
        B, T, Cx = x.shape
        assert Cx == C
        M = B * T
        odt = jnp.dtype(out_dtype) if out_dtype is not None else x.dtype
        o_item = odt.itemsize

        # Row tiling: dtype-native sublane alignment; split into >=2 tiles
        # when possible so both v7x TensorCores get work on the parallel axis.
        Mr = _round_up(M, row_align)
        TM = min(tm_max, Mr)
        if Mr // TM < 2 and Mr >= 2 * row_align:
            TM = _round_up((Mr + 1) // 2, row_align)

        def resident_vmem(tm):
            return (4 * Cp * Hp * itemsize          # W1 + W2, double-buffered
                    + 2 * tm * Cp * itemsize        # x tiles
                    + 2 * tm * Cp * o_item          # out tiles
                    + tm * Hp * (4 + itemsize)      # h (f32) + cast copy
                    + 4 * (Hp + Cp) * 4)            # biases

        def chunked_vmem(tm, th):
            return (4 * Cp * th * itemsize          # W1/W2 chunks, 2 buffers
                    + 2 * tm * Cp * itemsize        # x tiles
                    + 2 * tm * Cp * o_item          # out tiles
                    + tm * Cp * 4                   # f32 accumulator scratch
                    + tm * th * (4 + itemsize)      # h chunk + cast copy
                    + 4 * (th + Cp) * 4)            # biases

        # --- path selection against the VMEM budget ---
        path = force_path
        tm_r = TM
        if path != "chunked":
            while resident_vmem(tm_r) > budget and tm_r > row_align:
                tm_r = max(row_align, _round_up(tm_r // 2, row_align))
            if path is None:
                path = "resident" if resident_vmem(tm_r) <= budget else "chunked"

        if path == "resident":
            TM = tm_r
            Mp = _round_up(M, TM)
            grid = (Mp // TM,)
            in_specs = [
                pl.BlockSpec((TM, Cp), lambda i: (i, 0)),   # x row tile
                pl.BlockSpec((Cp, Hp), lambda i: (0, 0)),   # W1 (resident)
                pl.BlockSpec((1, Hp), lambda i: (0, 0)),    # b1
                pl.BlockSpec((Hp, Cp), lambda i: (0, 0)),   # W2 (resident)
                pl.BlockSpec((1, Cp), lambda i: (0, 0)),    # b2
            ]
            out_spec = pl.BlockSpec((TM, Cp), lambda i: (i, 0))
            scratch = []
            kernel = _ffn_resident_kernel
            dims = ("parallel",)
            weight_passes = 1
            vmem_need = resident_vmem(TM)
        else:
            TM_, TH = TM, TH0
            while (chunked_vmem(TM_, TH) > budget
                   and (TM_ > row_align or TH > h_align)):
                if TM_ >= TH and TM_ > row_align:
                    TM_ = max(row_align, _round_up(TM_ // 2, row_align))
                elif TH > h_align:
                    TH = max(h_align, TH // 2)   # Hp stays divisible by TH
                else:
                    break
            TM = TM_
            Mp = _round_up(M, TM)
            grid = (Mp // TM, Hp // TH)
            in_specs = [
                pl.BlockSpec((TM, Cp), lambda i, k: (i, 0)),  # x row tile
                pl.BlockSpec((Cp, TH), lambda i, k: (0, k)),  # W1 hidden chunk
                pl.BlockSpec((1, TH), lambda i, k: (0, k)),   # b1 chunk
                pl.BlockSpec((TH, Cp), lambda i, k: (k, 0)),  # W2 hidden chunk
                pl.BlockSpec((1, Cp), lambda i, k: (0, 0)),   # b2 (resident)
            ]
            out_spec = pl.BlockSpec((TM, Cp), lambda i, k: (i, 0))
            scratch = [pltpu.VMEM((TM, Cp), jnp.float32)]
            kernel = _ffn_chunked_kernel
            dims = ("parallel", "arbitrary")
            weight_passes = Mp // TM
            vmem_need = chunked_vmem(TM, TH)

        # --- activations: no-pad fast path when shapes already align ---
        x2d = x.reshape(M, C)
        if x2d.dtype != compute_dtype:
            x2d = x2d.astype(compute_dtype)
        if (Mp, Cp) != (M, C):
            x2d = jnp.pad(x2d, ((0, Mp - M), (0, Cp - C)))

        # Cost estimate reflecting the actual weight re-stream factor.
        bytes_accessed = (M * C * itemsize                     # x read
                          + M * C * o_item                     # out write
                          + weight_passes * 2 * C * H * itemsize
                          + (H + C) * 4)                       # biases
        cost = pl.CostEstimate(flops=4 * M * C * H, transcendentals=0,
                               bytes_accessed=int(bytes_accessed))

        vmem_limit = int(min(budget, max(2 * vmem_need, 32 * 1024 * 1024)))

        out = pl.pallas_call(
            kernel,
            out_shape=jax.ShapeDtypeStruct((Mp, Cp), odt),
            grid_spec=pltpu.PrefetchScalarGridSpec(
                num_scalar_prefetch=0,
                grid=grid,
                in_specs=in_specs,
                out_specs=out_spec,
                scratch_shapes=scratch),
            compiler_params=pltpu.CompilerParams(
                dimension_semantics=dims,
                vmem_limit_bytes=vmem_limit),
            cost_estimate=cost,
        )(x2d, w1p, b1p, w2p, b2p)

        if (Mp, Cp) != (M, C):
            out = out[:M, :C]
        return out.reshape(B, T, C)

    return apply


def feed_forward(x, w1, b1, w2, b2, **kwargs):
    """One-shot convenience wrapper. Prefer make_feed_forward(...) in hot
    paths so the weight pad/cast is done once, not per call."""
    return make_feed_forward(w1, b1, w2, b2, **kwargs)(x)


def init_params(key, n_inputs):
    """Deterministic init matching nn.Linear shapes (uniform +/- 1/sqrt(fan_in))."""
    H = 4 * n_inputs
    k1, k2, k3, k4 = jax.random.split(key, 4)
    bound1 = 1.0 / jnp.sqrt(n_inputs)
    bound2 = 1.0 / jnp.sqrt(H)
    w1 = jax.random.uniform(k1, (n_inputs, H), jnp.float32, -bound1, bound1)
    b1 = jax.random.uniform(k2, (H,), jnp.float32, -bound1, bound1)
    w2 = jax.random.uniform(k3, (H, n_inputs), jnp.float32, -bound2, bound2)
    b2 = jax.random.uniform(k4, (n_inputs,), jnp.float32, -bound2, bound2)
    return w1, b1, w2, b2


if __name__ == "__main__":
    B, T, C = 2, 8, 32          # batch, seq, n_inputs -> hidden = 128
    key = jax.random.PRNGKey(0)
    kx, kp = jax.random.split(key)
    x = jax.random.normal(kx, (B, T, C), jnp.float32)
    w1, b1, w2, b2 = init_params(kp, C)

    # Plain-JAX reference (eval-mode dropout == identity).
    ref = (jnp.maximum(x.reshape(-1, C) @ w1 + b1, 0.0) @ w2 + b2).reshape(B, T, C)

    # Default path: bf16 compute, weights-resident.
    ffn = make_feed_forward(w1, b1, w2, b2)          # compute_dtype=bf16
    y = jax.block_until_ready(ffn(x))
    assert y.shape == (B, T, C) and y.dtype == x.dtype
    assert jnp.allclose(y, ref, atol=5e-2, rtol=5e-2), "bf16 mismatch vs reference"

    # f32 compute, hidden-chunked accumulator path (exercises the other kernel).
    ffn_f32 = make_feed_forward(w1, b1, w2, b2, compute_dtype=jnp.float32,
                                force_path="chunked")
    y_f32 = jax.block_until_ready(ffn_f32(x))
    assert jnp.allclose(y_f32, ref, atol=1e-4, rtol=1e-5), "f32 mismatch vs reference"

    print("KERNEL_OK")
</pallas_src>

<mosaic_0001>
module attributes {stable_mosaic.version = 11 : i64} {
  func.func @_ffn_resident_kernel(%arg0: i32, %arg1: memref<16x128xbf16, #tpu.memory_space<vmem>>, %arg2: memref<128x128xbf16, #tpu.memory_space<vmem>>, %arg3: memref<1x128xf32, #tpu.memory_space<vmem>>, %arg4: memref<128x128xbf16, #tpu.memory_space<vmem>>, %arg5: memref<1x128xf32, #tpu.memory_space<vmem>>, %arg6: memref<16x128xf32, #tpu.memory_space<vmem>>) attributes {dimension_semantics = [#tpu.dimension_semantics<parallel>], iteration_bounds = array<i64: 1>, scalar_prefetch = 0 : i64, scratch_operands = 0 : i64, tpu.core_type = #tpu.core_type<tc>, window_params = [{transform_indices = @transform_0, window_bounds = array<i64: 16, 128>}, {pipeline_mode = #tpu.pipeline_mode<synchronous>, transform_indices = @transform_1, window_bounds = array<i64: 128, 128>}, {pipeline_mode = #tpu.pipeline_mode<synchronous>, transform_indices = @transform_2, window_bounds = array<i64: 1, 128>}, {pipeline_mode = #tpu.pipeline_mode<synchronous>, transform_indices = @transform_3, window_bounds = array<i64: 128, 128>}, {pipeline_mode = #tpu.pipeline_mode<synchronous>, transform_indices = @transform_4, window_bounds = array<i64: 1, 128>}, {transform_indices = @transform_5, window_bounds = array<i64: 16, 128>}]} {
    %c0 = arith.constant 0 : index
    %c0_0 = arith.constant 0 : index
    %0 = vector.load %arg1[%c0, %c0_0] : memref<16x128xbf16, #tpu.memory_space<vmem>>, vector<16x128xbf16>
    %c0_1 = arith.constant 0 : index
    %c0_2 = arith.constant 0 : index
    %1 = vector.load %arg2[%c0_1, %c0_2] : memref<128x128xbf16, #tpu.memory_space<vmem>>, vector<128x128xbf16>
    %cst = arith.constant dense<0.000000e+00> : vector<16x128xf32>
    %2 = tpu.matmul %0, %1, %cst {dimension_numbers = #tpu.dot_dimension_numbers<[1], [0], [0], [1], [0, 0, 1, 1], [], []>} : vector<16x128xbf16>, vector<128x128xbf16>, vector<16x128xf32> -> vector<16x128xf32>
    %c0_3 = arith.constant 0 : index
    %c0_4 = arith.constant 0 : index
    %3 = vector.load %arg3[%c0_3, %c0_4] : memref<1x128xf32, #tpu.memory_space<vmem>>, vector<1x128xf32>
    %4 = vector.broadcast %3 : vector<1x128xf32> to vector<16x128xf32>
    %5 = arith.addf %2, %4 : vector<16x128xf32>
    %cst_5 = arith.constant 0.000000e+00 : f32
    %6 = vector.broadcast %cst_5 : f32 to vector<16x128xf32>
    %7 = arith.maximumf %5, %6 : vector<16x128xf32>
    %8 = arith.truncf %7 : vector<16x128xf32> to vector<16x128xbf16>
    %c0_6 = arith.constant 0 : index
    %c0_7 = arith.constant 0 : index
    %9 = vector.load %arg4[%c0_6, %c0_7] : memref<128x128xbf16, #tpu.memory_space<vmem>>, vector<128x128xbf16>
    %cst_8 = arith.constant dense<0.000000e+00> : vector<16x128xf32>
    %10 = tpu.matmul %8, %9, %cst_8 {dimension_numbers = #tpu.dot_dimension_numbers<[1], [0], [0], [1], [0, 0, 1, 1], [], []>} : vector<16x128xbf16>, vector<128x128xbf16>, vector<16x128xf32> -> vector<16x128xf32>
    %c0_9 = arith.constant 0 : index
    %c0_10 = arith.constant 0 : index
    %11 = vector.load %arg5[%c0_9, %c0_10] : memref<1x128xf32, #tpu.memory_space<vmem>>, vector<1x128xf32>
    %12 = vector.broadcast %11 : vector<1x128xf32> to vector<16x128xf32>
    %13 = arith.addf %10, %12 : vector<16x128xf32>
    %c0_11 = arith.constant 0 : index
    %c0_12 = arith.constant 0 : index
    %14 = vector.load %arg6[%c0_11, %c0_12] : memref<16x128xf32, #tpu.memory_space<vmem>>, vector<16x128xf32>
    tpu.vector_store %arg6[%c0_11, %c0_12], %13 {strides = array<i32>} : memref<16x128xf32, #tpu.memory_space<vmem>>, vector<16x128xf32>,
    return
  }
  func.func @transform_0(%arg0: i32) -> (i32, i32) {
    %c0_i32 = arith.constant 0 : i32
    %c0_i32_0 = arith.constant 0 : i32
    return %arg0, %c0_i32 : i32, i32
  }
  func.func @transform_1(%arg0: i32) -> (i32, i32) {
    %c0_i32 = arith.constant 0 : i32
    %c0_i32_0 = arith.constant 0 : i32
    %c0_i32_1 = arith.constant 0 : i32
    return %c0_i32, %c0_i32_0 : i32, i32
  }
  func.func @transform_2(%arg0: i32) -> (i32, i32) {
    %c0_i32 = arith.constant 0 : i32
    %c0_i32_0 = arith.constant 0 : i32
    %c0_i32_1 = arith.constant 0 : i32
    return %c0_i32, %c0_i32_0 : i32, i32
  }
  func.func @transform_3(%arg0: i32) -> (i32, i32) {
    %c0_i32 = arith.constant 0 : i32
    %c0_i32_0 = arith.constant 0 : i32
    %c0_i32_1 = arith.constant 0 : i32
    return %c0_i32, %c0_i32_0 : i32, i32
  }
  func.func @transform_4(%arg0: i32) -> (i32, i32) {
    %c0_i32 = arith.constant 0 : i32
    %c0_i32_0 = arith.constant 0 : i32
    %c0_i32_1 = arith.constant 0 : i32
    return %c0_i32, %c0_i32_0 : i32, i32
  }
  func.func @transform_5(%arg0: i32) -> (i32, i32) {
    %c0_i32 = arith.constant 0 : i32
    %c0_i32_0 = arith.constant 0 : i32
    return %arg0, %c0_i32 : i32, i32
  }
}

</mosaic_0001>

<llo_original>
// kernel: tpu_custom_call.1
$region0: #{tpu_custom_call.1}
  #allocation0 [shape = 'u32[]', space=smem, size = 0x4, offset = 0x4, fixed_abs, tag = 'smem constant byte address 0x4 - core index']
  #allocation1 [shape = 'u32[144,128]{1,0:T(1,128)}', space=vmem, size = 0x12000, scoped, tag = 'internal scratch']
  %s0 = inlined_call_operand.hbm [shape: bf16[16,128], index: 0, kind: input, shape index: {}]
  %s1 = inlined_call_operand.hbm [shape: bf16[128,128], index: 1, kind: input, shape index: {}]
  %s2 = inlined_call_operand.vmem [shape: f32[1,128], index: 2, kind: input, shape index: {}]
  %s3 = inlined_call_operand.hbm [shape: bf16[128,128], index: 3, kind: input, shape index: {}]
  %s4 = inlined_call_operand.vmem [shape: f32[1,128], index: 4, kind: input, shape index: {}]
  %s5 = inlined_call_operand.hbm [shape: f32[16,128], index: 5, kind: output, shape index: {}]
  %s6 = sld [smem:[#allocation0]]
  $region42: #{tpu_custom_call.1} parent=0
    _
  %s8 = ssub.s32 1, %s6
  %s9 = scalar_select 0, %s8, %s6
  $region1: #{tpu_custom_call.1} parent=0
    #allocation2 [shape = 'u8[4096]{0}', space=vmem, size = 0x1000, scoped, tag = 'input window, operand 0, single buffered']
    #allocation3 [shape = 's32[1]{0}', space=sflag, size = 0x4, scoped, tag = 'scoped memory for tpu_custom_call.1']
    #allocation4 [shape = 's32[1]{0}', space=sflag, size = 0x4, scoped, tag = 'scoped memory for tpu_custom_call.1']
    #allocation5 [shape = 'u8[32768]{0}', space=vmem, size = 0x8000, scoped, tag = 'input window, operand 1, single buffered']
    #allocation6 [shape = 's32[1]{0}', space=sflag, size = 0x4, scoped, tag = 'scoped memory for tpu_custom_call.1']
    #allocation7 [shape = 'u8[32768]{0}', space=vmem, size = 0x8000, scoped, tag = 'input window, operand 3, single buffered']
    #allocation8 [shape = 'u8[8192]{0}', space=vmem, size = 0x2000, scoped, tag = 'output window, operand 0, single buffered']
    %10 = vsyncpa [#allocation3], 0
    %11 = vsyncpa [#allocation6], 0
    %12 = vsyncpa [#allocation4], 0
    // Predicated region
    $region2: #{tpu_custom_call.1} parent=1 // pred_check
      _
    $region3: #{tpu_custom_call.1} parent=1 // pred_check_branch
      %14 = sbr.rel (0) target = $region5
    $region4: #{tpu_custom_call.1} parent=1 // pred_region
      %s16 = ssub.s32 128, 128
      %17 = vsyncadd [#allocation3], %s16
      %s18 = sshll.u32 [#allocation2], 4
      %s19 = int_to_ptr.vmem [resolvable:$true] %s18
      %24 = dma.hbm_to_vmem [thread:$0]  %s0, 128, %s19, [#allocation3], 64, 64, 4
    $region5: #{tpu_custom_call.1} parent=1 // pred_fallthru
      _
    // Predicated region
    $region6: #{tpu_custom_call.1} parent=1 // pred_check
      _
    $region7: #{tpu_custom_call.1} parent=1 // pred_check_branch
      %26 = sbr.rel (0) target = $region9
    $region8: #{tpu_custom_call.1} parent=1 // pred_region
      %s28 = ssub.s32 1024, 1024
      %29 = vsyncadd [#allocation6], %s28
      %s30 = sshll.u32 [#allocation5], 4
      %s31 = int_to_ptr.vmem [resolvable:$true] %s30
      %36 = dma.hbm_to_vmem [thread:$0]  %s1, 1024, %s31, [#allocation6], 64, 64, 4
    $region9: #{tpu_custom_call.1} parent=1 // pred_fallthru
      _
    // Predicated region
    $region10: #{tpu_custom_call.1} parent=1 // pred_check
      _
    $region11: #{tpu_custom_call.1} parent=1 // pred_check_branch
      %38 = sbr.rel (0) target = $region13
    $region12: #{tpu_custom_call.1} parent=1 // pred_region
      _
    $region13: #{tpu_custom_call.1} parent=1 // pred_fallthru
      _
    // Predicated region
    $region14: #{tpu_custom_call.1} parent=1 // pred_check
      _
    $region15: #{tpu_custom_call.1} parent=1 // pred_check_branch
      %40 = sbr.rel (0) target = $region17
    $region16: #{tpu_custom_call.1} parent=1 // pred_region
      %s42 = ssub.s32 1024, 1024
      %43 = vsyncadd [#allocation6], %s42
      %s44 = sshll.u32 [#allocation7], 4
      %s45 = int_to_ptr.vmem [resolvable:$true] %s44
      %50 = dma.hbm_to_vmem [thread:$0]  %s3, 1024, %s45, [#allocation6], 64, 64, 4
    $region17: #{tpu_custom_call.1} parent=1 // pred_fallthru
      _
    // Predicated region
    $region18: #{tpu_custom_call.1} parent=1 // pred_check
      _
    $region19: #{tpu_custom_call.1} parent=1 // pred_check_branch
      %52 = sbr.rel (0) target = $region21
    $region20: #{tpu_custom_call.1} parent=1 // pred_region
      _
    $region21: #{tpu_custom_call.1} parent=1 // pred_fallthru
      _
    // Predicated region
    $region22: #{tpu_custom_call.1} parent=1 // pred_check
      _
    $region23: #{tpu_custom_call.1} parent=1 // pred_check_branch
      %54 = sbr.rel (0) target = $region25
    $region24: #{tpu_custom_call.1} parent=1 // pred_region
      %55 = dma.done [#allocation3], 128
    $region25: #{tpu_custom_call.1} parent=1 // pred_fallthru
      _
    // Predicated region
    $region26: #{tpu_custom_call.1} parent=1 // pred_check
      _
    $region27: #{tpu_custom_call.1} parent=1 // pred_check_branch
      %57 = sbr.rel (0) target = $region29
    $region28: #{tpu_custom_call.1} parent=1 // pred_region
      %58 = dma.done [#allocation6], 1024
    $region29: #{tpu_custom_call.1} parent=1 // pred_fallthru
      _
    // Predicated region
    $region30: #{tpu_custom_call.1} parent=1 // pred_check
      _
    $region31: #{tpu_custom_call.1} parent=1 // pred_check_branch
      %60 = sbr.rel (0) target = $region33
    $region32: #{tpu_custom_call.1} parent=1 // pred_region
      %61 = dma.done [#allocation6], 1024
    $region33: #{tpu_custom_call.1} parent=1 // pred_fallthru
      _
    %v63 = vld [vmem:[#allocation2] sm:$0xf]
    %v64 = vld [vmem:[#allocation2 + $0x4] sm:$0xf]
    %v65 = vld [vmem:[#allocation5] sm:$0xf]
    %v66 = vld [vmem:[#allocation5 + $0x4] sm:$0xf]
    %v67 = vld [vmem:[#allocation5 + $0x8] sm:$0xf]
    %v68 = vld [vmem:[#allocation5 + $0xc] sm:$0xf]
    %v69 = vld [vmem:[#allocation5 + $0x10] sm:$0xf]
    %v70 = vld [vmem:[#allocation5 + $0x14] sm:$0xf]
    %v71 = vld [vmem:[#allocation5 + $0x18] sm:$0xf]
    %v72 = vld [vmem:[#allocation5 + $0x1c] sm:$0xf]
    %v73 = vld [vmem:[#allocation5 + $0x20] sm:$0xf]
    %v74 = vld [vmem:[#allocation5 + $0x24] sm:$0xf]
    %v75 = vld [vmem:[#allocation5 + $0x28] sm:$0xf]
    %v76 = vld [vmem:[#allocation5 + $0x2c] sm:$0xf]
    %v77 = vld [vmem:[#allocation5 + $0x30] sm:$0xf]
    %v78 = vld [vmem:[#allocation5 + $0x34] sm:$0xf]
    %v79 = vld [vmem:[#allocation5 + $0x38] sm:$0xf]
    %v80 = vld [vmem:[#allocation5 + $0x3c] sm:$0xf]
    %v81 = vld [vmem:[%s2] sm:$0x1]
    %v83 = vlaneseq
    %v84 = vshrl.u32 %v83, 7
    %v85 = vsub.s32 0, %v84
    %v86 = vrot.slane %v81, %v85
    %v90 = vunpack.c.l.b16 %v63
    %v91 = vunpack.c.l.b16 %v64
    %v92 = vpack.c.b16 %v91, %v90
    %v110 = vunpack.c.l.b16 %v65
    %v111 = vunpack.c.l.b16 %v66
    %v112 = vunpack.c.l.b16 %v67
    %v113 = vunpack.c.l.b16 %v68
    %v114 = vunpack.c.l.b16 %v69
    %v115 = vunpack.c.l.b16 %v70
    %v116 = vunpack.c.l.b16 %v71
    %v117 = vunpack.c.l.b16 %v72
    %v118 = vunpack.c.l.b16 %v73
    %v119 = vunpack.c.l.b16 %v74
    %v120 = vunpack.c.l.b16 %v75
    %v121 = vunpack.c.l.b16 %v76
    %v122 = vunpack.c.l.b16 %v77
    %v123 = vunpack.c.l.b16 %v78
    %v124 = vunpack.c.l.b16 %v79
    %v125 = vunpack.c.l.b16 %v80
    %v126 = vpack.c.b16 %v111, %v110
    %v127 = vpack.c.b16 %v113, %v112
    %v128 = vpack.c.b16 %v115, %v114
    %v129 = vpack.c.b16 %v117, %v116
    %v130 = vpack.c.b16 %v119, %v118
    %v131 = vpack.c.b16 %v121, %v120
    %v132 = vpack.c.b16 %v123, %v122
    %v133 = vpack.c.b16 %v125, %v124
    %142 = vmatprep.subr.bf16.mxu0 0
    %143 = vmatpush1.bf16.msra.mxu0 %v126
    %144 = vmatprep.subr.bf16.mxu0 0
    %145 = vmatpush1.bf16.msra.mxu0 %v127
    %146 = vmatprep.subr.bf16.mxu0 0
    %147 = vmatpush1.bf16.msra.mxu0 %v128
    %148 = vmatprep.subr.bf16.mxu0 0
    %149 = vmatpush1.bf16.msra.mxu0 %v129
    %150 = vmatprep.subr.bf16.mxu0 0
    %151 = vmatpush1.bf16.msra.mxu0 %v130
    %152 = vmatprep.subr.bf16.mxu0 0
    %153 = vmatpush1.bf16.msra.mxu0 %v131
    %154 = vmatprep.subr.bf16.mxu0 0
    %155 = vmatpush1.bf16.msra.mxu0 %v132
    %156 = vmatprep.subr.bf16.mxu0 0
    %157 = vmatpush1.bf16.msra.mxu0 %v133
    %158 = vmatprep.subr.bf16.mxu0 0
    %159 = vmatpush1.bf16.msra.mxu0 0
    %160 = vmatprep.subr.bf16.mxu0 0
    %161 = vmatpush1.bf16.msra.mxu0 0
    %162 = vmatprep.subr.bf16.mxu0 0
    %163 = vmatpush1.bf16.msra.mxu0 0
    %164 = vmatprep.subr.bf16.mxu0 0
    %165 = vmatpush1.bf16.msra.mxu0 0
    %166 = vmatprep.subr.bf16.mxu0 0
    %167 = vmatpush1.bf16.msra.mxu0 0
    %168 = vmatprep.subr.bf16.mxu0 0
    %169 = vmatpush1.bf16.msra.mxu0 0
    %170 = vmatprep.subr.bf16.mxu0 0
    %171 = vmatpush1.bf16.msra.mxu0 0
    %172 = vmatprep.subr.bf16.mxu0 0
    %173 = vmatpush1.bf16.msra.mxu0 0
    %174 = vmatprep.mubr.bf16.mxu0 0
    %175 = vmatmul.mubr.bf16.gmra.mrb[0].mxu0 %v92
    %v176 = vpop.f32.mrb[0].mxu0
    %v177 = vadd.f32 %v86, %v176
    %v178 = vpop.f32.mrb[0].mxu0
    %v179 = vpop.f32.mrb[0].mxu0
    %v180 = vadd.f32 %v86, %v179
    %v181 = vpop.f32.mrb[0].mxu0
    %182 = vdwg.mxu0
    %v183 = vmax.f32 %v177, 0.0
    %v184 = vmax.f32 %v180, 0.0
    %v185 = vpack.c.bf16 %v184, %v183
    %v186 = vld [vmem:[#allocation7] sm:$0xf]
    %v187 = vld [vmem:[#allocation7 + $0x4] sm:$0xf]
    %v188 = vld [vmem:[#allocation7 + $0x8] sm:$0xf]
    %v189 = vld [vmem:[#allocation7 + $0xc] sm:$0xf]
    %v190 = vld [vmem:[#allocation7 + $0x10] sm:$0xf]
    %v191 = vld [vmem:[#allocation7 + $0x14] sm:$0xf]
    %v192 = vld [vmem:[#allocation7 + $0x18] sm:$0xf]
    %v193 = vld [vmem:[#allocation7 + $0x1c] sm:$0xf]
    %v194 = vld [vmem:[#allocation7 + $0x20] sm:$0xf]
    %v195 = vld [vmem:[#allocation7 + $0x24] sm:$0xf]
    %v196 = vld [vmem:[#allocation7 + $0x28] sm:$0xf]
    %v197 = vld [vmem:[#allocation7 + $0x2c] sm:$0xf]
    %v198 = vld [vmem:[#allocation7 + $0x30] sm:$0xf]
    %v199 = vld [vmem:[#allocation7 + $0x34] sm:$0xf]
    %v200 = vld [vmem:[#allocation7 + $0x38] sm:$0xf]
    %v201 = vld [vmem:[#allocation7 + $0x3c] sm:$0xf]
    %v202 = vld [vmem:[%s4] sm:$0x1]
    %v204 = vlaneseq
    %v205 = vshrl.u32 %v204, 7
    %v206 = vsub.s32 0, %v205
    %v207 = vrot.slane %v202, %v206
    %v225 = vunpack.c.l.b16 %v186
    %v226 = vunpack.c.l.b16 %v187
    %v227 = vunpack.c.l.b16 %v188
    %v228 = vunpack.c.l.b16 %v189
    %v229 = vunpack.c.l.b16 %v190
    %v230 = vunpack.c.l.b16 %v191
    %v231 = vunpack.c.l.b16 %v192
    %v232 = vunpack.c.l.b16 %v193
    %v233 = vunpack.c.l.b16 %v194
    %v234 = vunpack.c.l.b16 %v195
    %v235 = vunpack.c.l.b16 %v196
    %v236 = vunpack.c.l.b16 %v197
    %v237 = vunpack.c.l.b16 %v198
    %v238 = vunpack.c.l.b16 %v199
    %v239 = vunpack.c.l.b16 %v200
    %v240 = vunpack.c.l.b16 %v201
    %v241 = vpack.c.b16 %v226, %v225
    %v242 = vpack.c.b16 %v228, %v227
    %v243 = vpack.c.b16 %v230, %v229
    %v244 = vpack.c.b16 %v232, %v231
    %v245 = vpack.c.b16 %v234, %v233
    %v246 = vpack.c.b16 %v236, %v235
    %v247 = vpack.c.b16 %v238, %v237
    %v248 = vpack.c.b16 %v240, %v239
    %257 = vmatprep.subr.bf16.mxu0 0
    %258 = vmatpush1.bf16.msra.mxu0 %v241
    %259 = vmatprep.subr.bf16.mxu0 0
    %260 = vmatpush1.bf16.msra.mxu0 %v242
    %261 = vmatprep.subr.bf16.mxu0 0
    %262 = vmatpush1.bf16.msra.mxu0 %v243
    %263 = vmatprep.subr.bf16.mxu0 0
    %264 = vmatpush1.bf16.msra.mxu0 %v244
    %265 = vmatprep.subr.bf16.mxu0 0
    %266 = vmatpush1.bf16.msra.mxu0 %v245
    %267 = vmatprep.subr.bf16.mxu0 0
    %268 = vmatpush1.bf16.msra.mxu0 %v246
    %269 = vmatprep.subr.bf16.mxu0 0
    %270 = vmatpush1.bf16.msra.mxu0 %v247
    %271 = vmatprep.subr.bf16.mxu0 0
    %272 = vmatpush1.bf16.msra.mxu0 %v248
    %273 = vmatprep.subr.bf16.mxu0 0
    %274 = vmatpush1.bf16.msra.mxu0 0
    %275 = vmatprep.subr.bf16.mxu0 0
    %276 = vmatpush1.bf16.msra.mxu0 0
    %277 = vmatprep.subr.bf16.mxu0 0
    %278 = vmatpush1.bf16.msra.mxu0 0
    %279 = vmatprep.subr.bf16.mxu0 0
    %280 = vmatpush1.bf16.msra.mxu0 0
    %281 = vmatprep.subr.bf16.mxu0 0
    %282 = vmatpush1.bf16.msra.mxu0 0
    %283 = vmatprep.subr.bf16.mxu0 0
    %284 = vmatpush1.bf16.msra.mxu0 0
    %285 = vmatprep.subr.bf16.mxu0 0
    %286 = vmatpush1.bf16.msra.mxu0 0
    %287 = vmatprep.subr.bf16.mxu0 0
    %288 = vmatpush1.bf16.msra.mxu0 0
    %289 = vmatprep.mubr.bf16.mxu0 0
    %290 = vmatmul.mubr.bf16.gmra.mrb[0].mxu0 %v185
    %v291 = vpop.f32.mrb[0].mxu0
    %v292 = vadd.f32 %v207, %v291
    %v293 = vpop.f32.mrb[0].mxu0
    %v294 = vpop.f32.mrb[0].mxu0
    %v295 = vadd.f32 %v207, %v294
    %v296 = vpop.f32.mrb[0].mxu0
    %297 = vdwg.mxu0
    %298 = vst [vmem:[#allocation8] sm:$0xff] %v292
    %299 = vst [vmem:[#allocation8 + $0x8] sm:$0xff] %v295
    // Predicated region
    $region34: #{tpu_custom_call.1} parent=1 // pred_check
      _
    $region35: #{tpu_custom_call.1} parent=1 // pred_check_branch
      %301 = sbr.rel (0) target = $region37
    $region36: #{tpu_custom_call.1} parent=1 // pred_region
      %s303 = ssub.s32 256, 256
      %304 = vsyncadd [#allocation4], %s303
      %s305 = sshll.u32 [#allocation8], 4
      %s306 = int_to_ptr.vmem [resolvable:$true] %s305
      %311 = dma.vmem_to_hbm [thread:$0]  %s306, 256, %s5, [#allocation4], 128, 128, 8
    $region37: #{tpu_custom_call.1} parent=1 // pred_fallthru
      _
    // Predicated region
    $region38: #{tpu_custom_call.1} parent=1 // pred_check
      _
    $region39: #{tpu_custom_call.1} parent=1 // pred_check_branch
      %313 = sbr.rel (0) target = $region41
    $region40: #{tpu_custom_call.1} parent=1 // pred_region
      %314 = dma.done [#allocation4], 256
    $region41: #{tpu_custom_call.1} parent=1 // pred_fallthru
      _
    %315 = vsyncpa [#allocation3], 1
    %316 = vsyncpa [#allocation6], 1
    %317 = vsyncpa [#allocation4], 1

</llo_original>
